<compile_context>
chip_gen: v6e
topology: v6e:2x2x1
jax: 0.10.0
libtpu: 0.0.40
codegen_flags: <defaults>
</compile_context>

<pallas_src>
import functools

import jax
import jax.numpy as jnp
from jax import lax
from jax.experimental import pallas as pl
from jax.experimental.pallas import tpu as pltpu


# ---------------------------------------------------------------------------
# Static pyramid-pooling plan
# ---------------------------------------------------------------------------
def _pool_bins(L, levels):
    """(start, end) bins for ceil-mode pyramid max pooling, in output order."""
    bins = []
    for n in levels:
        ks = -(-L // n)                      # kernel = stride = ceil(L / n)
        nb = -(-L // ks)                     # ceil_mode=True bin count
        bins += [(i * ks, min(i * ks + ks, L)) for i in range(nb)]
    return bins


def _pool_plan(L, levels):
    """Static hierarchical pooling plan.

    Returns (steps, n_bins).  Each step is either
      ("direct",  out_idx, start, end)   -> reduce com[:, start:end, :]
      ("combine", out_idx, (src_idx,..)) -> max over previously computed bins
    Steps are ordered finest level first so coarser levels can reuse finer
    partial maxima whenever their boundaries align exactly; otherwise the bin
    falls back to a direct reduction, so the plan is exact for any L / levels.
    """
    per_level = []
    for n in levels:
        ks = -(-L // n)
        nb = -(-L // ks)
        per_level.append([(i * ks, min(i * ks + ks, L)) for i in range(nb)])
    offsets, off = [], 0
    for b in per_level:
        offsets.append(off)
        off += len(b)
    n_bins = off

    steps = []
    order = sorted(range(len(levels)), key=lambda li: levels[li], reverse=True)
    computed = []                            # level indices already planned
    for li in order:
        for bi, (s, e) in enumerate(per_level[li]):
            out_idx = offsets[li] + bi
            step = ("direct", out_idx, s, e)
            # Prefer the coarsest already-computed finer level (fewest maxes).
            for mj in reversed(computed):
                fb = per_level[mj]
                idxs = [j for j, (cs, ce) in enumerate(fb) if cs >= s and ce <= e]
                if not idxs:
                    continue
                contiguous = all(fb[idxs[k]][1] == fb[idxs[k + 1]][0]
                                 for k in range(len(idxs) - 1))
                if fb[idxs[0]][0] == s and fb[idxs[-1]][1] == e and contiguous:
                    step = ("combine", out_idx,
                            tuple(offsets[mj] + j for j in idxs))
                    break
            steps.append(step)
        computed.append(li)
    return tuple(steps), n_bins


# ---------------------------------------------------------------------------
# Kernel
# ---------------------------------------------------------------------------
def sblock_kernel(x_ref, scale_ref, wconv_ref, bconv_ref, wfnn_ref, bfnn_ref,
                  vec_ref, com_ref, *, K, pad, pool_steps):
    BB, L, C_in = x_ref.shape
    C_out = wconv_ref.shape[2]
    H = wfnn_ref.shape[1]

    x = x_ref[...]                                        # (BB, L, C_in) f32

    # ---- SConv1d: K rolled+masked taps, each a small bf16 MXU matmul ------
    # pltpu.roll runs on the XLU slot; the boundary mask is a VPU select.
    row = None
    acc = None
    for t in range(K):
        off = t - pad
        if off == 0:
            xt = x
        else:
            if row is None:
                row = lax.broadcasted_iota(jnp.int32, (BB, L, C_in), 1)
            rolled = pltpu.roll(x, shift=(-off) % L, axis=1)
            keep = (row >= -off) if off < 0 else (row < L - off)
            xt = jnp.where(keep, rolled, 0.0)
        part = jnp.dot(xt.reshape(BB * L, C_in).astype(jnp.bfloat16),
                       wconv_ref[t],                      # (C_in, C_out) bf16
                       preferred_element_type=jnp.float32)
        acc = part if acc is None else acc + part

    # f32 epilogue (bias + template-conditioned per-channel scale).
    conv = acc + bconv_ref[...]                           # (BB*L, C_out)
    vec = conv.reshape(BB, L, C_out) * scale_ref[...]     # (BB,1,C_out) bcast

    # Dropout(0.5) in eval mode => identity.
    # TODO(synk): lane-dense packing of the width-8 vec writeback skipped —
    # the (L,C_out)->(L*C_out) relayout is unreliable at width 8 and the
    # store is ~1 KiB here; revisit if B*L*C_out grows.
    vec_ref[...] = vec.astype(vec_ref.dtype)

    # ---- fnn: Linear(C_out, H), batch folded into the matmul M dimension --
    com = jnp.dot(vec.reshape(BB * L, C_out).astype(jnp.bfloat16),
                  wfnn_ref[...],                          # (C_out, H) bf16
                  preferred_element_type=jnp.float32) + bfnn_ref[...]
    com = com.reshape(BB, L, H)

    # ---- PostFlexiblePooling: hierarchical pyramid max, ONE dense store ---
    n_bins = com_ref.shape[1]
    vals = [None] * n_bins
    for step in pool_steps:
        if step[0] == "direct":
            _, idx, s, e = step
            vals[idx] = jnp.max(com[:, s:e, :], axis=1, keepdims=True)
        else:
            _, idx, srcs = step
            v = vals[srcs[0]]
            for j in srcs[1:]:
                v = jnp.maximum(v, vals[j])
            vals[idx] = v
    com_ref[...] = jnp.concatenate(vals, axis=1).astype(com_ref.dtype)


# ---------------------------------------------------------------------------
# Wrapper
# ---------------------------------------------------------------------------
def _vmem_bytes_estimate(BB, L, C_in, C_out, H, n_bins, K):
    """Rough per-grid-step VMEM footprint (double-buffered I/O + temps)."""
    f32, bf16, db = 4, 2, 2
    io = db * BB * (L * C_in + C_out + L * C_out + n_bins * H) * f32
    w = db * ((K * C_in * C_out + C_out * H) * bf16 + (C_out + H) * f32)
    tmp = BB * L * H * f32                  # fnn activation (largest temp)
    tmp += K * BB * L * C_in * f32          # rolled / masked taps + row iota
    tmp += BB * L * (C_in + C_out) * bf16   # bf16 matmul operand copies
    tmp += BB * n_bins * H * f32            # stacked pooled rows
    return io + w + tmp


def _pick_batch_block(B, L, C_in, C_out, H, n_bins, K,
                      target_rows=4096, vmem_budget=12 * 1024 * 1024):
    # Target BB*L matmul rows in the 2K-8K range (amortizes the ~0.35us
    # per-grid-step overhead, fills the MXU M dim), but keep >=2 grid steps
    # when B >= 2 so "parallel" actually shards batch over v7x's two TCs,
    # and stay well inside v7x's 64 MiB physical VMEM.
    bb = max(1, -(-target_rows // L))
    bb = min(bb, max(1, -(-B // 2)))
    while bb > 1 and _vmem_bytes_estimate(bb, L, C_in, C_out, H,
                                          n_bins, K) > vmem_budget:
        bb = max(1, bb // 2)
    return bb


def sblock_forward(vec, template, params, *, k_size=3, pad=1,
                   levels=(1, 2, 3, 4), batch_block=None):
    """vec: (B, L, C_in) f32, template: (B, T) f32 -> (vec_out, com_out)."""
    B, L, C_in = vec.shape
    wconv = params["w_conv"]                 # (K, C_in, C_out) f32
    K = k_size
    assert wconv.shape[0] == K
    C_out = wconv.shape[2]
    H = params["w_fnn"].shape[1]
    # Conv1d with this padding must preserve L for the fnn / pooling path.
    assert L + 2 * pad - K + 1 == L, "k_size must equal 2*pad + 1"
    # (BB, L, C) -> (BB*L, C) must be a free sublane relayout.
    assert L % 8 == 0, "L must be a multiple of 8"

    # Hoisted template conditioning: one batched XLA matmul -> (B, 1, C_out).
    scale = (template @ params["w_tpl"] + params["b_tpl"])[:, None, :]

    pool_steps, n_bins = _pool_plan(L, levels)

    if batch_block is None:
        batch_block = _pick_batch_block(B, L, C_in, C_out, H, n_bins, K)
    BB = batch_block

    # Pad batch to a multiple of BB (handles prime / awkward B); padded rows
    # produce finite garbage and are sliced off below.
    B_pad = -(-B // BB) * BB
    if B_pad != B:
        vec_in = jnp.pad(vec, ((0, B_pad - B), (0, 0), (0, 0)))
        scale = jnp.pad(scale, ((0, B_pad - B), (0, 0), (0, 0)))
    else:
        vec_in = vec

    # bf16 weights (halves HBM->VMEM weight traffic; matmuls accumulate f32).
    w_conv = wconv.astype(jnp.bfloat16)            # (K, C_in, C_out)
    w_fnn = params["w_fnn"].astype(jnp.bfloat16)   # (C_out, H)

    kernel = functools.partial(sblock_kernel, K=K, pad=pad,
                               pool_steps=pool_steps)

    out_shapes = (jax.ShapeDtypeStruct((B_pad, L, C_out), vec.dtype),
                  jax.ShapeDtypeStruct((B_pad, n_bins, H), vec.dtype))

    in_specs = [
        pl.BlockSpec((BB, L, C_in), lambda b: (b, 0, 0)),       # activations
        pl.BlockSpec((BB, 1, C_out), lambda b: (b, 0, 0)),      # template scale
        pl.BlockSpec((K, C_in, C_out), lambda b: (0, 0, 0)),    # conv W (bf16)
        pl.BlockSpec((1, C_out), lambda b: (0, 0)),             # conv bias (f32)
        pl.BlockSpec((C_out, H), lambda b: (0, 0)),             # fnn W (bf16)
        pl.BlockSpec((1, H), lambda b: (0, 0)),                 # fnn bias (f32)
    ]
    out_specs = (
        pl.BlockSpec((BB, L, C_out), lambda b: (b, 0, 0)),
        pl.BlockSpec((BB, n_bins, H), lambda b: (b, 0, 0)),
    )

    flops = 2 * B_pad * L * (K * C_in * C_out + C_out * H)
    bytes_accessed = (4 * B_pad * (L * C_in + C_out + L * C_out + n_bins * H)
                      + 2 * (K * C_in * C_out + C_out * H)
                      + 4 * (C_out + H))

    vec_out, com_out = pl.pallas_call(
        kernel,
        out_shape=out_shapes,
        grid=(B_pad // BB,),
        in_specs=in_specs,
        out_specs=out_specs,
        compiler_params=pltpu.CompilerParams(
            dimension_semantics=("parallel",),       # batch over TCs (v7x)
            vmem_limit_bytes=32 * 1024 * 1024),      # headroom, < v7x 64 MiB
        cost_estimate=pl.CostEstimate(flops=flops, transcendentals=0,
                                      bytes_accessed=bytes_accessed),
    )(vec_in, scale, w_conv, params["b_conv"], w_fnn, params["b_fnn"])

    if B_pad != B:
        vec_out, com_out = vec_out[:B], com_out[:B]
    return vec_out, com_out


# ---------------------------------------------------------------------------
# Params + references
# ---------------------------------------------------------------------------
def init_params(key, in_dim, out_dim, k_size, template_dim, hidden=128):
    ks = jax.random.split(key, 5)
    return {
        "w_conv": 0.1 * jax.random.normal(ks[0], (k_size, in_dim, out_dim), jnp.float32),
        "b_conv": 0.1 * jax.random.normal(ks[1], (1, out_dim), jnp.float32),
        "w_tpl": 0.1 * jax.random.normal(ks[2], (template_dim, out_dim), jnp.float32),
        "b_tpl": jnp.ones((1, out_dim), jnp.float32),
        "w_fnn": 0.1 * jax.random.normal(ks[3], (out_dim, hidden), jnp.float32),
        "b_fnn": 0.1 * jax.random.normal(ks[4], (1, hidden), jnp.float32),
    }


def _reference(vec, template, params, *, k_size=3, pad=1, levels=(1, 2, 3, 4)):
    """Pure-f32 reference with the module's semantics."""
    B, L, _ = vec.shape
    w = params["w_conv"]
    xp = jnp.pad(vec, ((0, 0), (pad, pad), (0, 0)))
    conv = sum(jnp.einsum("bli,io->blo", xp[:, t:t + L, :], w[t])
               for t in range(k_size)) + params["b_conv"]
    scale = template @ params["w_tpl"] + params["b_tpl"]
    v = conv * scale[:, None, :]
    com = v @ params["w_fnn"] + params["b_fnn"]
    rows = [jnp.max(com[:, s:e, :], axis=1) for (s, e) in _pool_bins(L, levels)]
    return v, jnp.stack(rows, axis=1)


def _reference_bf16(vec, template, params, *, k_size=3, pad=1, levels=(1, 2, 3, 4)):
    """Reference that mirrors the kernel's bf16 MXU inputs / f32 accumulation."""
    B, L, _ = vec.shape
    bf = jnp.bfloat16
    w = params["w_conv"].astype(bf)
    xp = jnp.pad(vec, ((0, 0), (pad, pad), (0, 0))).astype(bf)
    conv = sum(jnp.einsum("bli,io->blo", xp[:, t:t + L, :], w[t],
                          preferred_element_type=jnp.float32)
               for t in range(k_size)) + params["b_conv"]
    scale = template @ params["w_tpl"] + params["b_tpl"]
    v = conv * scale[:, None, :]
    com = jnp.einsum("blc,ch->blh", v.astype(bf), params["w_fnn"].astype(bf),
                     preferred_element_type=jnp.float32) + params["b_fnn"]
    rows = [jnp.max(com[:, s:e, :], axis=1) for (s, e) in _pool_bins(L, levels)]
    return v, jnp.stack(rows, axis=1)


if __name__ == "__main__":
    B, L, C, K, T = 2, 16, 8, 3, 6   # batch, seq, in_dim=out_dim, k_size, template dim
    key = jax.random.PRNGKey(0)
    kv, kt, kp = jax.random.split(key, 3)

    vec = jax.random.normal(kv, (B, L, C), jnp.float32)
    template = jax.random.normal(kt, (B, T), jnp.float32)
    params = init_params(kp, C, C, K, T)

    vec_out, com_out = sblock_forward(vec, template, params, k_size=K)
    jax.block_until_ready((vec_out, com_out))

    assert vec_out.shape == (B, L, C), vec_out.shape
    assert com_out.shape == (B, 10, 128), com_out.shape
    assert jnp.all(jnp.isfinite(vec_out)) and jnp.all(jnp.isfinite(com_out))

    # Tight check vs a bf16-MXU-matched reference; loose check vs the pure-f32
    # module reference (bounds the rounding introduced by bf16 matmul inputs).
    vec_rb, com_rb = _reference_bf16(vec, template, params, k_size=K)
    assert jnp.allclose(vec_out, vec_rb, rtol=1e-2, atol=1e-2)
    assert jnp.allclose(com_out, com_rb, rtol=1e-2, atol=1e-2)

    vec_rf, com_rf = _reference(vec, template, params, k_size=K)
    assert jnp.allclose(vec_out, vec_rf, rtol=5e-2, atol=5e-2)
    assert jnp.allclose(com_out, com_rf, rtol=5e-2, atol=5e-2)

    print("KERNEL_OK")
</pallas_src>

<mosaic_0001>
module attributes {stable_mosaic.version = 11 : i64} {
  func.func @sblock_kernel(%arg0: i32, %arg1: memref<1x16x8xf32, #tpu.memory_space<vmem>>, %arg2: memref<1x1x8xf32, #tpu.memory_space<vmem>>, %arg3: memref<3x8x8xbf16, #tpu.memory_space<vmem>>, %arg4: memref<1x8xf32, #tpu.memory_space<vmem>>, %arg5: memref<8x128xbf16, #tpu.memory_space<vmem>>, %arg6: memref<1x128xf32, #tpu.memory_space<vmem>>, %arg7: memref<1x16x8xf32, #tpu.memory_space<vmem>>, %arg8: memref<1x10x128xf32, #tpu.memory_space<vmem>>) attributes {dimension_semantics = [#tpu.dimension_semantics<parallel>], iteration_bounds = array<i64: 2>, scalar_prefetch = 0 : i64, scratch_operands = 0 : i64, tpu.core_type = #tpu.core_type<tc>, window_params = [{transform_indices = @transform_0, window_bounds = array<i64: 1, 16, 8>}, {transform_indices = @transform_1, window_bounds = array<i64: 1, 1, 8>}, {pipeline_mode = #tpu.pipeline_mode<synchronous>, transform_indices = @transform_2, window_bounds = array<i64: 3, 8, 8>}, {pipeline_mode = #tpu.pipeline_mode<synchronous>, transform_indices = @transform_3, window_bounds = array<i64: 1, 8>}, {pipeline_mode = #tpu.pipeline_mode<synchronous>, transform_indices = @transform_4, window_bounds = array<i64: 8, 128>}, {pipeline_mode = #tpu.pipeline_mode<synchronous>, transform_indices = @transform_5, window_bounds = array<i64: 1, 128>}, {transform_indices = @transform_6, window_bounds = array<i64: 1, 16, 8>}, {transform_indices = @transform_7, window_bounds = array<i64: 1, 10, 128>}]} {
    %c0 = arith.constant 0 : index
    %c0_0 = arith.constant 0 : index
    %c0_1 = arith.constant 0 : index
    %0 = vector.load %arg1[%c0, %c0_0, %c0_1] : memref<1x16x8xf32, #tpu.memory_space<vmem>>, vector<1x16x8xf32>
    %1 = tpu.iota {dimensions = array<i32: 1>} : vector<1x16x8xi32>
    %c1_i32 = arith.constant 1 : i32
    %2 = tpu.dynamic_rotate %0 by %c1_i32 dim 1 : vector<1x16x8xf32>, i32 -> vector<1x16x8xf32>
    %c1_i32_2 = arith.constant 1 : i32
    %3 = vector.broadcast %c1_i32_2 : i32 to vector<1x16x8xi32>
    %4 = arith.cmpi sge, %1, %3 : vector<1x16x8xi32>
    %cst = arith.constant 0.000000e+00 : f32
    %5 = vector.broadcast %cst : f32 to vector<1x16x8xf32>
    %6 = arith.select %4, %2, %5 : vector<1x16x8xi1>, vector<1x16x8xf32>
    %7 = vector.shape_cast %6 : vector<1x16x8xf32> to vector<16x8xf32>
    %8 = arith.truncf %7 : vector<16x8xf32> to vector<16x8xbf16>
    %c0_3 = arith.constant 0 : index
    %c0_4 = arith.constant 0 : index
    %c0_5 = arith.constant 0 : index
    %9 = vector.load %arg3[%c0_3, %c0_4, %c0_5] : memref<3x8x8xbf16, #tpu.memory_space<vmem>>, vector<1x8x8xbf16>
    %10 = vector.shape_cast %9 : vector<1x8x8xbf16> to vector<8x8xbf16>
    %cst_6 = arith.constant dense<0.000000e+00> : vector<16x8xf32>
    %11 = tpu.matmul %8, %10, %cst_6 {dimension_numbers = #tpu.dot_dimension_numbers<[1], [0], [0], [1], [0, 0, 1, 1], [], []>} : vector<16x8xbf16>, vector<8x8xbf16>, vector<16x8xf32> -> vector<16x8xf32>
    %12 = vector.shape_cast %0 : vector<1x16x8xf32> to vector<16x8xf32>
    %13 = arith.truncf %12 : vector<16x8xf32> to vector<16x8xbf16>
    %c1 = arith.constant 1 : index
    %c0_7 = arith.constant 0 : index
    %c0_8 = arith.constant 0 : index
    %14 = vector.load %arg3[%c1, %c0_7, %c0_8] : memref<3x8x8xbf16, #tpu.memory_space<vmem>>, vector<1x8x8xbf16>
    %15 = vector.shape_cast %14 : vector<1x8x8xbf16> to vector<8x8xbf16>
    %cst_9 = arith.constant dense<0.000000e+00> : vector<16x8xf32>
    %16 = tpu.matmul %13, %15, %cst_9 {dimension_numbers = #tpu.dot_dimension_numbers<[1], [0], [0], [1], [0, 0, 1, 1], [], []>} : vector<16x8xbf16>, vector<8x8xbf16>, vector<16x8xf32> -> vector<16x8xf32>
    %17 = arith.addf %11, %16 : vector<16x8xf32>
    %c15_i32 = arith.constant 15 : i32
    %18 = tpu.dynamic_rotate %0 by %c15_i32 dim 1 : vector<1x16x8xf32>, i32 -> vector<1x16x8xf32>
    %c15_i32_10 = arith.constant 15 : i32
    %19 = vector.broadcast %c15_i32_10 : i32 to vector<1x16x8xi32>
    %20 = arith.cmpi slt, %1, %19 : vector<1x16x8xi32>
    %cst_11 = arith.constant 0.000000e+00 : f32
    %21 = vector.broadcast %cst_11 : f32 to vector<1x16x8xf32>
    %22 = arith.select %20, %18, %21 : vector<1x16x8xi1>, vector<1x16x8xf32>
    %23 = vector.shape_cast %22 : vector<1x16x8xf32> to vector<16x8xf32>
    %24 = arith.truncf %23 : vector<16x8xf32> to vector<16x8xbf16>
    %c2 = arith.constant 2 : index
    %c0_12 = arith.constant 0 : index
    %c0_13 = arith.constant 0 : index
    %25 = vector.load %arg3[%c2, %c0_12, %c0_13] : memref<3x8x8xbf16, #tpu.memory_space<vmem>>, vector<1x8x8xbf16>
    %26 = vector.shape_cast %25 : vector<1x8x8xbf16> to vector<8x8xbf16>
    %cst_14 = arith.constant dense<0.000000e+00> : vector<16x8xf32>
    %27 = tpu.matmul %24, %26, %cst_14 {dimension_numbers = #tpu.dot_dimension_numbers<[1], [0], [0], [1], [0, 0, 1, 1], [], []>} : vector<16x8xbf16>, vector<8x8xbf16>, vector<16x8xf32> -> vector<16x8xf32>
    %28 = arith.addf %17, %27 : vector<16x8xf32>
    %c0_15 = arith.constant 0 : index
    %c0_16 = arith.constant 0 : index
    %29 = vector.load %arg4[%c0_15, %c0_16] : memref<1x8xf32, #tpu.memory_space<vmem>>, vector<1x8xf32>
    %30 = vector.broadcast %29 : vector<1x8xf32> to vector<16x8xf32>
    %31 = arith.addf %28, %30 : vector<16x8xf32>
    %32 = vector.shape_cast %31 : vector<16x8xf32> to vector<1x16x8xf32>
    %c0_17 = arith.constant 0 : index
    %c0_18 = arith.constant 0 : index
    %c0_19 = arith.constant 0 : index
    %33 = vector.load %arg2[%c0_17, %c0_18, %c0_19] : memref<1x1x8xf32, #tpu.memory_space<vmem>>, vector<1x1x8xf32>
    %34 = vector.broadcast %33 : vector<1x1x8xf32> to vector<1x16x8xf32>
    %35 = arith.mulf %32, %34 : vector<1x16x8xf32>
    %c0_20 = arith.constant 0 : index
    %c0_21 = arith.constant 0 : index
    %c0_22 = arith.constant 0 : index
    %36 = vector.load %arg7[%c0_20, %c0_21, %c0_22] : memref<1x16x8xf32, #tpu.memory_space<vmem>>, vector<1x16x8xf32>
    tpu.vector_store %arg7[%c0_20, %c0_21, %c0_22], %35 {strides = array<i32>} : memref<1x16x8xf32, #tpu.memory_space<vmem>>, vector<1x16x8xf32>,
    %37 = vector.shape_cast %35 : vector<1x16x8xf32> to vector<16x8xf32>
    %38 = arith.truncf %37 : vector<16x8xf32> to vector<16x8xbf16>
    %c0_23 = arith.constant 0 : index
    %c0_24 = arith.constant 0 : index
    %39 = vector.load %arg5[%c0_23, %c0_24] : memref<8x128xbf16, #tpu.memory_space<vmem>>, vector<8x128xbf16>
    %cst_25 = arith.constant dense<0.000000e+00> : vector<16x128xf32>
    %40 = tpu.matmul %38, %39, %cst_25 {dimension_numbers = #tpu.dot_dimension_numbers<[1], [0], [0], [1], [0, 0, 1, 1], [], []>} : vector<16x8xbf16>, vector<8x128xbf16>, vector<16x128xf32> -> vector<16x128xf32>
    %c0_26 = arith.constant 0 : index
    %c0_27 = arith.constant 0 : index
    %41 = vector.load %arg6[%c0_26, %c0_27] : memref<1x128xf32, #tpu.memory_space<vmem>>, vector<1x128xf32>
    %42 = vector.broadcast %41 : vector<1x128xf32> to vector<16x128xf32>
    %43 = arith.addf %40, %42 : vector<16x128xf32>
    %44 = vector.shape_cast %43 : vector<16x128xf32> to vector<1x16x128xf32>
    %45 = vector.extract_strided_slice %44 {offsets = [0, 0, 0], sizes = [1, 4, 128], strides = [1, 1, 1]} : vector<1x16x128xf32> to vector<1x4x128xf32>
    %cst_28 = arith.constant dense<0xFF800000> : vector<1x128xf32>
    %46 = vector.multi_reduction <maximumf>, %45, %cst_28 [1] : vector<1x4x128xf32> to vector<1x128xf32>
    %47 = vector.shape_cast %46 : vector<1x128xf32> to vector<1x1x128xf32>
    %48 = vector.extract_strided_slice %44 {offsets = [0, 4, 0], sizes = [1, 4, 128], strides = [1, 1, 1]} : vector<1x16x128xf32> to vector<1x4x128xf32>
    %cst_29 = arith.constant dense<0xFF800000> : vector<1x128xf32>
    %49 = vector.multi_reduction <maximumf>, %48, %cst_29 [1] : vector<1x4x128xf32> to vector<1x128xf32>
    %50 = vector.shape_cast %49 : vector<1x128xf32> to vector<1x1x128xf32>
    %51 = vector.extract_strided_slice %44 {offsets = [0, 8, 0], sizes = [1, 4, 128], strides = [1, 1, 1]} : vector<1x16x128xf32> to vector<1x4x128xf32>
    %cst_30 = arith.constant dense<0xFF800000> : vector<1x128xf32>
    %52 = vector.multi_reduction <maximumf>, %51, %cst_30 [1] : vector<1x4x128xf32> to vector<1x128xf32>
    %53 = vector.shape_cast %52 : vector<1x128xf32> to vector<1x1x128xf32>
    %54 = vector.extract_strided_slice %44 {offsets = [0, 12, 0], sizes = [1, 4, 128], strides = [1, 1, 1]} : vector<1x16x128xf32> to vector<1x4x128xf32>
    %cst_31 = arith.constant dense<0xFF800000> : vector<1x128xf32>
    %55 = vector.multi_reduction <maximumf>, %54, %cst_31 [1] : vector<1x4x128xf32> to vector<1x128xf32>
    %56 = vector.shape_cast %55 : vector<1x128xf32> to vector<1x1x128xf32>
    %57 = vector.extract_strided_slice %44 {offsets = [0, 0, 0], sizes = [1, 6, 128], strides = [1, 1, 1]} : vector<1x16x128xf32> to vector<1x6x128xf32>
    %cst_32 = arith.constant dense<0xFF800000> : vector<1x128xf32>
    %58 = vector.multi_reduction <maximumf>, %57, %cst_32 [1] : vector<1x6x128xf32> to vector<1x128xf32>
    %59 = vector.shape_cast %58 : vector<1x128xf32> to vector<1x1x128xf32>
    %60 = vector.extract_strided_slice %44 {offsets = [0, 6, 0], sizes = [1, 6, 128], strides = [1, 1, 1]} : vector<1x16x128xf32> to vector<1x6x128xf32>
    %cst_33 = arith.constant dense<0xFF800000> : vector<1x128xf32>
    %61 = vector.multi_reduction <maximumf>, %60, %cst_33 [1] : vector<1x6x128xf32> to vector<1x128xf32>
    %62 = vector.shape_cast %61 : vector<1x128xf32> to vector<1x1x128xf32>
    %63 = arith.maximumf %47, %50 : vector<1x1x128xf32>
    %64 = arith.maximumf %53, %56 : vector<1x1x128xf32>
    %65 = arith.maximumf %63, %64 : vector<1x1x128xf32>
    %66 = tpu.concatenate %65, %63, %64, %59, %62, %56, %47, %50, %53, %56 in 1 : vector<1x1x128xf32>, vector<1x1x128xf32>, vector<1x1x128xf32>, vector<1x1x128xf32>, vector<1x1x128xf32>, vector<1x1x128xf32>, vector<1x1x128xf32>, vector<1x1x128xf32>, vector<1x1x128xf32>, vector<1x1x128xf32> -> vector<1x10x128xf32>
    %c0_34 = arith.constant 0 : index
    %c0_35 = arith.constant 0 : index
    %c0_36 = arith.constant 0 : index
    %67 = vector.load %arg8[%c0_34, %c0_35, %c0_36] : memref<1x10x128xf32, #tpu.memory_space<vmem>>, vector<1x10x128xf32>
    tpu.vector_store %arg8[%c0_34, %c0_35, %c0_36], %66 {strides = array<i32>} : memref<1x10x128xf32, #tpu.memory_space<vmem>>, vector<1x10x128xf32>,
    return
  }
  func.func @transform_0(%arg0: i32) -> (i32, i32, i32) {
    %c0_i32 = arith.constant 0 : i32
    %c0_i32_0 = arith.constant 0 : i32
    %c0_i32_1 = arith.constant 0 : i32
    return %arg0, %c0_i32, %c0_i32_0 : i32, i32, i32
  }
  func.func @transform_1(%arg0: i32) -> (i32, i32, i32) {
    %c0_i32 = arith.constant 0 : i32
    %c0_i32_0 = arith.constant 0 : i32
    %c0_i32_1 = arith.constant 0 : i32
    return %arg0, %c0_i32, %c0_i32_0 : i32, i32, i32
  }
  func.func @transform_2(%arg0: i32) -> (i32, i32, i32) {
    %c0_i32 = arith.constant 0 : i32
    %c0_i32_0 = arith.constant 0 : i32
    %c0_i32_1 = arith.constant 0 : i32
    %c0_i32_2 = arith.constant 0 : i32
    return %c0_i32, %c0_i32_0, %c0_i32_1 : i32, i32, i32
  }
  func.func @transform_3(%arg0: i32) -> (i32, i32) {
    %c0_i32 = arith.constant 0 : i32
    %c0_i32_0 = arith.constant 0 : i32
    %c0_i32_1 = arith.constant 0 : i32
    return %c0_i32, %c0_i32_0 : i32, i32
  }
  func.func @transform_4(%arg0: i32) -> (i32, i32) {
    %c0_i32 = arith.constant 0 : i32
    %c0_i32_0 = arith.constant 0 : i32
    %c0_i32_1 = arith.constant 0 : i32
    return %c0_i32, %c0_i32_0 : i32, i32
  }
  func.func @transform_5(%arg0: i32) -> (i32, i32) {
    %c0_i32 = arith.constant 0 : i32
    %c0_i32_0 = arith.constant 0 : i32
    %c0_i32_1 = arith.constant 0 : i32
    return %c0_i32, %c0_i32_0 : i32, i32
  }
  func.func @transform_6(%arg0: i32) -> (i32, i32, i32) {
    %c0_i32 = arith.constant 0 : i32
    %c0_i32_0 = arith.constant 0 : i32
    %c0_i32_1 = arith.constant 0 : i32
    return %arg0, %c0_i32, %c0_i32_0 : i32, i32, i32
  }
  func.func @transform_7(%arg0: i32) -> (i32, i32, i32) {
    %c0_i32 = arith.constant 0 : i32
    %c0_i32_0 = arith.constant 0 : i32
    %c0_i32_1 = arith.constant 0 : i32
    return %arg0, %c0_i32, %c0_i32_0 : i32, i32, i32
  }
}

</mosaic_0001>

<llo_original>
// kernel: tpu_custom_call.1
$region0: #{tpu_custom_call.1}
  #allocation0 [shape = 'u32[]', space=smem, size = 0x4, offset = 0x4, fixed_abs, tag = 'smem constant byte address 0x4 - core index']
  #allocation1 [shape = 'u32[144,128]{1,0:T(1,128)}', space=vmem, size = 0x12000, scoped, tag = 'internal scratch']
  %s0 = inlined_call_operand.vmem [shape: f32[2,16,8], index: 0, kind: input, shape index: {}]
  %s1 = inlined_call_operand.vmem [shape: f32[2,1,8], index: 1, kind: input, shape index: {}]
  %s2 = inlined_call_operand.vmem [shape: bf16[3,8,8], index: 2, kind: input, shape index: {}]
  %s3 = inlined_call_operand.vmem [shape: f32[1,8], index: 3, kind: input, shape index: {}]
  %s4 = inlined_call_operand.vmem [shape: bf16[8,128], index: 4, kind: input, shape index: {}]
  %s5 = inlined_call_operand.vmem [shape: f32[1,128], index: 5, kind: input, shape index: {}]
  %s6 = inlined_call_operand.vmem [shape: f32[2,16,8], index: 6, kind: output, shape index: {0}]
  %s7 = inlined_call_operand.vmem [shape: f32[2,10,128], index: 7, kind: output, shape index: {1}]
  %8 = xla_tuple %s6, %s7
  %s9 = sld [smem:[#allocation0]]
  $region65: #{tpu_custom_call.1} parent=0
    _
  %s11 = ssub.s32 1, %s9
  %s12 = scalar_select 0, %s11, %s9
  loop: start=0, step=1, limit=4
  $region2: #{tpu_custom_call.1} parent=0 // loop_pre_header
    _
  $region3: #{tpu_custom_call.1} parent=0 // loop_header
    %s14 = sphi 0, %s18
    %p15 = scmp.ge.s32.totalorder %s14, 4
    %s24 = sphi 0, %s26
    %s27 = sphi 0, %s24
    %s28 = sphi 0, %s27
    %s44 = sphi 0, %s28
    %s50 = sphi 0, %s52
    %s53 = sphi 0, %s50
    %s54 = sphi 0, %s53
    %s70 = sphi 0, %s54
    %s74 = sphi 0, %s74
    %s76 = sphi 0, %s74
    %s77 = sphi 0, %s76
    %s91 = sphi 0, %s77
    %s95 = sphi 0, %s95
    %s97 = sphi 0, %s95
    %s98 = sphi 0, %s97
    %s112 = sphi 0, %s98
    %s116 = sphi 0, %s116
    %s118 = sphi 0, %s116
    %s119 = sphi 0, %s118
    %s133 = sphi 0, %s119
    %s137 = sphi 0, %s137
    %s139 = sphi 0, %s137
    %s140 = sphi 0, %s139
    %s154 = sphi 0, %s140
    %s160 = sphi 0, %s162
    %s163 = sphi 0, %s160
    %s164 = sphi 0, %s163
    %s180 = sphi 0, %s164
    %s186 = sphi 0, %s188
    %s189 = sphi 0, %s186
    %s190 = sphi 0, %s189
    %s206 = sphi 0, %s190
  $region4: #{tpu_custom_call.1} parent=0 // loop_header_branch
    %17 = sbr.rel (%p15) target = $region8
  $region5: #{tpu_custom_call.1} parent=0 // loop_body
    %s19 = ssub.s32 %s14, 1
    %s20 = ssub.s32 %s14, 2
    %s21 = sadd.s32 %s14, 1
    %s22 = ssub.s32 %s14, %s21
    %p23 = scmp.eq.s32.totalorder %s22, 0
    %s25 = sadd.s32 %s24, 1
    %s26 = scalar_select %p23, %s24, %s25
    %p29 = pneg %p23
    %p30 = scmp.eq.s32.totalorder %s14, 1
    %p31 = por %p29, %p30
    %p32 = scmp.ne.s32.totalorder %s24, %s27
    %p33 = scmp.eq.s32.totalorder %s14, 0
    %p34 = por %p32, %p33
    %p35 = scmp.ne.s32.totalorder %s24, %s27
    %p36 = scmp.eq.s32.totalorder %s19, 1
    %p37 = por %p35, %p36
    %p38 = scmp.ne.s32.totalorder %s27, %s28
    %p39 = scmp.eq.s32.totalorder %s19, 0
    %p40 = por %p38, %p39
    %p41 = scmp.ne.s32.totalorder %s27, %s28
    %p42 = scmp.eq.s32.totalorder %s20, 1
    %p43 = por %p41, %p42
    %p45 = scmp.ne.s32.totalorder %s28, %s44
    %p46 = scmp.eq.s32.totalorder %s20, 0
    %p47 = por %p45, %p46
    %s48 = ssub.s32 %s14, %s21
    %p49 = scmp.eq.s32.totalorder %s48, 0
    %s51 = sadd.s32 %s50, 1
    %s52 = scalar_select %p49, %s50, %s51
    %p55 = pneg %p49
    %p56 = scmp.eq.s32.totalorder %s14, 1
    %p57 = por %p55, %p56
    %p58 = scmp.ne.s32.totalorder %s50, %s53
    %p59 = scmp.eq.s32.totalorder %s14, 0
    %p60 = por %p58, %p59
    %p61 = scmp.ne.s32.totalorder %s50, %s53
    %p62 = scmp.eq.s32.totalorder %s19, 1
    %p63 = por %p61, %p62
    %p64 = scmp.ne.s32.totalorder %s53, %s54
    %p65 = scmp.eq.s32.totalorder %s19, 0
    %p66 = por %p64, %p65
    %p67 = scmp.ne.s32.totalorder %s53, %s54
    %p68 = scmp.eq.s32.totalorder %s20, 1
    %p69 = por %p67, %p68
    %p71 = scmp.ne.s32.totalorder %s54, %s70
    %p72 = scmp.eq.s32.totalorder %s20, 0
    %p73 = por %p71, %p72
    %s75 = sadd.s32 %s74, 1
    %p78 = scmp.eq.s32.totalorder %s14, 1
    %p79 = scmp.ne.s32.totalorder %s74, %s76
    %p80 = scmp.eq.s32.totalorder %s14, 0
    %p81 = por %p79, %p80
    %p82 = scmp.ne.s32.totalorder %s74, %s76
    %p83 = scmp.eq.s32.totalorder %s19, 1
    %p84 = por %p82, %p83
    %p85 = scmp.ne.s32.totalorder %s76, %s77
    %p86 = scmp.eq.s32.totalorder %s19, 0
    %p87 = por %p85, %p86
    %p88 = scmp.ne.s32.totalorder %s76, %s77
    %p89 = scmp.eq.s32.totalorder %s20, 1
    %p90 = por %p88, %p89
    %p92 = scmp.ne.s32.totalorder %s77, %s91
    %p93 = scmp.eq.s32.totalorder %s20, 0
    %p94 = por %p92, %p93
    %s96 = sadd.s32 %s95, 1
    %p99 = scmp.eq.s32.totalorder %s14, 1
    %p100 = scmp.ne.s32.totalorder %s95, %s97
    %p101 = scmp.eq.s32.totalorder %s14, 0
    %p102 = por %p100, %p101
    %p103 = scmp.ne.s32.totalorder %s95, %s97
    %p104 = scmp.eq.s32.totalorder %s19, 1
    %p105 = por %p103, %p104
    %p106 = scmp.ne.s32.totalorder %s97, %s98
    %p107 = scmp.eq.s32.totalorder %s19, 0
    %p108 = por %p106, %p107
    %p109 = scmp.ne.s32.totalorder %s97, %s98
    %p110 = scmp.eq.s32.totalorder %s20, 1
    %p111 = por %p109, %p110
    %p113 = scmp.ne.s32.totalorder %s98, %s112
    %p114 = scmp.eq.s32.totalorder %s20, 0
    %p115 = por %p113, %p114
    %s117 = sadd.s32 %s116, 1
    %p120 = scmp.eq.s32.totalorder %s14, 1
    %p121 = scmp.ne.s32.totalorder %s116, %s118
    %p122 = scmp.eq.s32.totalorder %s14, 0
    %p123 = por %p121, %p122
    %p124 = scmp.ne.s32.totalorder %s116, %s118
    %p125 = scmp.eq.s32.totalorder %s19, 1
    %p126 = por %p124, %p125
    %p127 = scmp.ne.s32.totalorder %s118, %s119
    %p128 = scmp.eq.s32.totalorder %s19, 0
    %p129 = por %p127, %p128
    %p130 = scmp.ne.s32.totalorder %s118, %s119
    %p131 = scmp.eq.s32.totalorder %s20, 1
    %p132 = por %p130, %p131
    %p134 = scmp.ne.s32.totalorder %s119, %s133
    %p135 = scmp.eq.s32.totalorder %s20, 0
    %p136 = por %p134, %p135
    %s138 = sadd.s32 %s137, 1
    %p141 = scmp.eq.s32.totalorder %s14, 1
    %p142 = scmp.ne.s32.totalorder %s137, %s139
    %p143 = scmp.eq.s32.totalorder %s14, 0
    %p144 = por %p142, %p143
    %p145 = scmp.ne.s32.totalorder %s137, %s139
    %p146 = scmp.eq.s32.totalorder %s19, 1
    %p147 = por %p145, %p146
    %p148 = scmp.ne.s32.totalorder %s139, %s140
    %p149 = scmp.eq.s32.totalorder %s19, 0
    %p150 = por %p148, %p149
    %p151 = scmp.ne.s32.totalorder %s139, %s140
    %p152 = scmp.eq.s32.totalorder %s20, 1
    %p153 = por %p151, %p152
    %p155 = scmp.ne.s32.totalorder %s140, %s154
    %p156 = scmp.eq.s32.totalorder %s20, 0
    %p157 = por %p155, %p156
    %s158 = ssub.s32 %s14, %s21
    %p159 = scmp.eq.s32.totalorder %s158, 0
    %s161 = sadd.s32 %s160, 1
    %s162 = scalar_select %p159, %s160, %s161
    %p165 = pneg %p159
    %p166 = scmp.eq.s32.totalorder %s14, 1
    %p167 = por %p165, %p166
    %p168 = scmp.ne.s32.totalorder %s160, %s163
    %p169 = scmp.eq.s32.totalorder %s14, 0
    %p170 = por %p168, %p169
    %p171 = scmp.ne.s32.totalorder %s160, %s163
    %p172 = scmp.eq.s32.totalorder %s19, 1
    %p173 = por %p171, %p172
    %p174 = scmp.ne.s32.totalorder %s163, %s164
    %p175 = scmp.eq.s32.totalorder %s19, 0
    %p176 = por %p174, %p175
    %p177 = scmp.ne.s32.totalorder %s163, %s164
    %p178 = scmp.eq.s32.totalorder %s20, 1
    %p179 = por %p177, %p178
    %p181 = scmp.ne.s32.totalorder %s164, %s180
    %p182 = scmp.eq.s32.totalorder %s20, 0
    %p183 = por %p181, %p182
    %s184 = ssub.s32 %s14, %s21
    %p185 = scmp.eq.s32.totalorder %s184, 0
    %s187 = sadd.s32 %s186, 1
    %s188 = scalar_select %p185, %s186, %s187
    %p191 = pneg %p185
    %p192 = scmp.eq.s32.totalorder %s14, 1
    %p193 = por %p191, %p192
    %p194 = scmp.ne.s32.totalorder %s186, %s189
    %p195 = scmp.eq.s32.totalorder %s14, 0
    %p196 = por %p194, %p195
    %p197 = scmp.ne.s32.totalorder %s186, %s189
    %p198 = scmp.eq.s32.totalorder %s19, 1
    %p199 = por %p197, %p198
    %p200 = scmp.ne.s32.totalorder %s189, %s190
    %p201 = scmp.eq.s32.totalorder %s19, 0
    %p202 = por %p200, %p201
    %p203 = scmp.ne.s32.totalorder %s189, %s190
    %p204 = scmp.eq.s32.totalorder %s20, 1
    %p205 = por %p203, %p204
    %p207 = scmp.ne.s32.totalorder %s190, %s206
    %p208 = scmp.eq.s32.totalorder %s20, 0
    %p209 = por %p207, %p208
    %p210 = scmp.le.s32.totalorder 1, %s14
    %p211 = scmp.lt.s32.totalorder %s14, 3
    %p212 = pnand %p210, %p211
    %p213 = pneg %p212
    // Predicated region
    $region9: #{tpu_custom_call.1} parent=5 // pred_check
      _
    $region10: #{tpu_custom_call.1} parent=5 // pred_check_branch
      %215 = sbr.rel (%p212) target = $region12
    $region11: #{tpu_custom_call.1} parent=5 // pred_region
      %s216 = ssub.s32 %s14, 1
      // Predicated region
      $region13: #{tpu_custom_call.1} parent=11 // pred_check
        %p217 = pneg %p87
      $region14: #{tpu_custom_call.1} parent=11 // pred_check_branch
        %219 = sbr.rel (%p217) target = $region16
      $region15: #{tpu_custom_call.1} parent=11 // pred_region
        _
      $region16: #{tpu_custom_call.1} parent=11 // pred_fallthru
        _
      // Predicated region
      $region17: #{tpu_custom_call.1} parent=11 // pred_check
        %p220 = pneg %p108
      $region18: #{tpu_custom_call.1} parent=11 // pred_check_branch
        %222 = sbr.rel (%p220) target = $region20
      $region19: #{tpu_custom_call.1} parent=11 // pred_region
        _
      $region20: #{tpu_custom_call.1} parent=11 // pred_fallthru
        _
      // Predicated region
      $region21: #{tpu_custom_call.1} parent=11 // pred_check
        %p223 = pneg %p129
      $region22: #{tpu_custom_call.1} parent=11 // pred_check_branch
        %225 = sbr.rel (%p223) target = $region24
      $region23: #{tpu_custom_call.1} parent=11 // pred_region
        _
      $region24: #{tpu_custom_call.1} parent=11 // pred_fallthru
        _
      // Predicated region
      $region25: #{tpu_custom_call.1} parent=11 // pred_check
        %p226 = pneg %p150
      $region26: #{tpu_custom_call.1} parent=11 // pred_check_branch
        %228 = sbr.rel (%p226) target = $region28
      $region27: #{tpu_custom_call.1} parent=11 // pred_region
        _
      $region28: #{tpu_custom_call.1} parent=11 // pred_fallthru
        _
    $region12: #{tpu_custom_call.1} parent=5 // pred_fallthru
      _
    %p229 = scmp.lt.s32.totalorder %s14, 2
    // Predicated region
    $region29: #{tpu_custom_call.1} parent=5 // pred_check
      %p230 = pneg %p229
    $region30: #{tpu_custom_call.1} parent=5 // pred_check_branch
      %232 = sbr.rel (%p230) target = $region32
    $region31: #{tpu_custom_call.1} parent=5 // pred_region
      // Predicated region
      $region33: #{tpu_custom_call.1} parent=31 // pred_check
        %p233 = pneg %p34
      $region34: #{tpu_custom_call.1} parent=31 // pred_check_branch
        %235 = sbr.rel (%p233) target = $region36
      $region35: #{tpu_custom_call.1} parent=31 // pred_region
        %p236 = scmp.lt.s32.totalorder %s14, 1
        %s237 = scalar_select %p236, %s14, 1
        %s238 = smul.addr %s237, 2
        %s239 = smul.addr %s238, 8
        %s240 = scalar_lea.vmem %s0, %s239
      $region36: #{tpu_custom_call.1} parent=31 // pred_fallthru
        _
      // Predicated region
      $region37: #{tpu_custom_call.1} parent=31 // pred_check
        %p241 = pneg %p60
      $region38: #{tpu_custom_call.1} parent=31 // pred_check_branch
        %243 = sbr.rel (%p241) target = $region40
      $region39: #{tpu_custom_call.1} parent=31 // pred_region
        %p244 = scmp.lt.s32.totalorder %s14, 1
        %s245 = scalar_select %p244, %s14, 1
        %s246 = scalar_lea.vmem %s1, %s245
      $region40: #{tpu_custom_call.1} parent=31 // pred_fallthru
        _
    $region32: #{tpu_custom_call.1} parent=5 // pred_fallthru
      _
    %p247 = scmp.le.s32.totalorder 1, %s14
    %p248 = scmp.lt.s32.totalorder %s14, 3
    %p249 = pnand %p247, %p248
    %p250 = pneg %p249
    // Predicated region
    $region41: #{tpu_custom_call.1} parent=5 // pred_check
      _
    $region42: #{tpu_custom_call.1} parent=5 // pred_check_branch
      %252 = sbr.rel (%p249) target = $region44
    $region43: #{tpu_custom_call.1} parent=5 // pred_region
      %s253 = ssub.s32 %s14, 1
      %p254 = scmp.lt.s32.totalorder %s19, 1
      %s255 = scalar_select %p254, %s19, 1
      %s256 = smul.addr %s255, 2
      %s257 = smul.addr %s256, 8
      %s258 = scalar_lea.vmem %s0, %s257
      %p259 = pneg %p40
      %p260 = pneg %p37
      %p261 = scmp.lt.s32.totalorder %s19, 1
      %s262 = scalar_select %p261, %s19, 1
      %s263 = scalar_lea.vmem %s1, %s262
      %p264 = pneg %p66
      %p265 = pneg %p63
      %p266 = pneg %p87
      %p267 = pneg %p84
      %p268 = pneg %p108
      %p269 = pneg %p105
      %p270 = pneg %p129
      %p271 = pneg %p126
      %p272 = pneg %p150
      %p273 = pneg %p147
      %p274 = pneg %p176
      %p275 = pneg %p173
      %p276 = scmp.lt.s32.totalorder %s19, 1
      %s277 = scalar_select %p276, %s19, 1
      %s278 = smul.addr %s277, 2
      %s279 = smul.addr %s278, 8
      %s280 = scalar_lea.vmem %s6, %s279
      %p281 = pneg %p202
      %p282 = pneg %p199
      %p283 = scmp.lt.s32.totalorder %s19, 1
      %s284 = scalar_select %p283, %s19, 1
      %s285 = smul.addr %s284, 2
      %s286 = smul.addr %s285, 8
      %s287 = scalar_lea.vmem %s7, %s286
      %p288 = scmp.lt.s32.totalorder %s19, 1
      %s289 = scalar_select %p288, %s19, 1
      %s290 = smul.addr %s289, 2
      %s291 = smul.addr %s290, 8
      %s292 = scalar_lea.vmem %s0, %s291
      %p293 = scmp.lt.s32.totalorder %s19, 1
      %s294 = scalar_select %p293, %s19, 1
      %s295 = scalar_lea.vmem %s1, %s294
      %p296 = scmp.lt.s32.totalorder %s19, 1
      %s297 = scalar_select %p296, %s19, 1
      %s298 = smul.addr %s297, 2
      %s299 = smul.addr %s298, 8
      %s300 = scalar_lea.vmem %s6, %s299
      %p301 = scmp.lt.s32.totalorder %s19, 1
      %s302 = scalar_select %p301, %s19, 1
      %s303 = smul.addr %s302, 2
      %s304 = smul.addr %s303, 8
      %s305 = scalar_lea.vmem %s7, %s304
      %v307 = vld [vmem:[%s292] sm:$0xff]
      %v308 = vld [vmem:[%s292 + $0x8] sm:$0xff]
      %v309 = vlaneseq
      %v310 = vshrl.u32 %v309, 7
      %v311 = vadd.s32 %v310, 8
      %v312 = vrot.slane %v307, 7
      %v313 = vrot.slane %v308, 7
      %vm314 = vcmp.lt.s32.totalorder %v310, 1
      %v315 = vsel %vm314, %v312, %v313
      %v316 = vsel %vm314, %v313, %v312
      %vm317 = vcmp.ge.s32.totalorder %v310, 1
      %vm318 = vcmp.ge.s32.totalorder %v311, 1
      %v319 = vsel %vm317, %v316, 0.0
      %v320 = vsel %vm318, %v315, 0.0
      %v321 = vpack.c.bf16 %v320, %v319
      %v322 = vld [vmem:[%s2] sm:$0xf]
      %v323 = vpack.c.bf16 %v308, %v307
      %s324 = scalar_lea.vmem %s2, 4
      %v325 = vld [vmem:[%s324] sm:$0xf]
      %vm326 = vcmask 64512
      %v328 = vsel %vm326, %v323, 0
      %vm330 = vcmask 1043456
      %v332 = vsel %vm330, %v325, 0
      %334 = vmatprep.subr.bf16.mxu0 0
      %335 = vmatpush1.bf16.msra.mxu0 0
      %336 = vmatprep.subr.bf16.mxu0 0
      %337 = vmatpush1.bf16.msra.mxu0 0
      %338 = vmatprep.subr.bf16.mxu0 0
      %339 = vmatpush1.bf16.msra.mxu0 0
      %340 = vmatprep.subr.bf16.mxu0 0
      %341 = vmatpush1.bf16.msra.mxu0 0
      %342 = vmatprep.subr.bf16.mxu0 0
      %343 = vmatpush1.bf16.msra.mxu0 0
      %344 = vmatprep.subr.bf16.mxu0 0
      %345 = vmatpush1.bf16.msra.mxu0 0
      %346 = vmatprep.subr.bf16.mxu0 0
      %347 = vmatpush1.bf16.msra.mxu0 0
      %348 = vmatprep.subr.bf16.mxu0 0
      %349 = vmatpush1.bf16.msra.mxu0 %v332
      %350 = vmatprep.subr.bf16.mxu0 0
      %351 = vmatpush2.bf16.msra.mxu0 0
      %352 = vmatprep.subr.bf16.mxu0 0
      %353 = vmatpush2.bf16.msra.mxu0 0
      %354 = vmatprep.subr.bf16.mxu0 0
      %355 = vmatpush2.bf16.msra.mxu0 0
      %356 = vmatprep.subr.bf16.mxu0 0
      %357 = vmatpush2.bf16.msra.mxu0 0
      %358 = vmatprep.subr.bf16.mxu0 0
      %359 = vmatpush2.bf16.msra.mxu0 0
      %360 = vmatprep.subr.bf16.mxu0 0
      %361 = vmatpush2.bf16.msra.mxu0 0
      %362 = vmatprep.subr.bf16.mxu0 0
      %363 = vmatpush2.bf16.msra.mxu0 0
      %364 = vmatprep.subr.bf16.mxu0 0
      %365 = vmatpush2.bf16.msra.mxu0 0
      %366 = vmatprep.mubr.bf16.mxu0 0
      %367 = vmatmul.mubr.bf16.gmra.mxu0 %v328
      %v368 = vpop.f32.mrf.mxu0
      %v369 = vadd.f32 0.0, %v368
      %v370 = vpop.f32.mrf.mxu0
      %v371 = vpop.f32.mrf.mxu0
      %v372 = vadd.f32 0.0, %v371
      %v373 = vpop.f32.mrf.mxu0
      %374 = vdwg.mxu0
      %v376 = vsel %vm326, %v321, 0
      %v379 = vsel %vm330, %v322, 0
      %381 = vmatprep.subr.bf16.mxu0 0
      %382 = vmatpush1.bf16.msra.mxu0 0
      %383 = vmatprep.subr.bf16.mxu0 0
      %384 = vmatpush1.bf16.msra.mxu0 0
      %385 = vmatprep.subr.bf16.mxu0 0
      %386 = vmatpush1.bf16.msra.mxu0 0
      %387 = vmatprep.subr.bf16.mxu0 0
      %388 = vmatpush1.bf16.msra.mxu0 0
      %389 = vmatprep.subr.bf16.mxu0 0
      %390 = vmatpush1.bf16.msra.mxu0 0
      %391 = vmatprep.subr.bf16.mxu0 0
      %392 = vmatpush1.bf16.msra.mxu0 0
      %393 = vmatprep.subr.bf16.mxu0 0
      %394 = vmatpush1.bf16.msra.mxu0 0
      %395 = vmatprep.subr.bf16.mxu0 0
      %396 = vmatpush1.bf16.msra.mxu0 %v379
      %397 = vmatprep.subr.bf16.mxu0 0
      %398 = vmatpush2.bf16.msra.mxu0 0
      %399 = vmatprep.subr.bf16.mxu0 0
      %400 = vmatpush2.bf16.msra.mxu0 0
      %401 = vmatprep.subr.bf16.mxu0 0
      %402 = vmatpush2.bf16.msra.mxu0 0
      %403 = vmatprep.subr.bf16.mxu0 0
      %404 = vmatpush2.bf16.msra.mxu0 0
      %405 = vmatprep.subr.bf16.mxu0 0
      %406 = vmatpush2.bf16.msra.mxu0 0
      %407 = vmatprep.subr.bf16.mxu0 0
      %408 = vmatpush2.bf16.msra.mxu0 0
      %409 = vmatprep.subr.bf16.mxu0 0
      %410 = vmatpush2.bf16.msra.mxu0 0
      %411 = vmatprep.subr.bf16.mxu0 0
      %412 = vmatpush2.bf16.msra.mxu0 0
      %413 = vmatprep.mubr.bf16.mxu0 0
      %414 = vmatmul.mubr.bf16.gmra.mxu0 %v376
      %v415 = vpop.f32.mrf.mxu0
      %v416 = vadd.f32 %v369, %v415
      %v417 = vpop.f32.mrf.mxu0
      %v418 = vpop.f32.mrf.mxu0
      %v419 = vadd.f32 %v372, %v418
      %v420 = vpop.f32.mrf.mxu0
      %421 = vdwg.mxu0
      %v422 = vrot.slane %v307, 1
      %v423 = vrot.slane %v308, 1
      %vm424 = vcmp.lt.s32.totalorder %v310, 7
      %v425 = vsel %vm424, %v422, %v423
      %v426 = vsel %vm424, %v423, %v422
      %vm427 = vcmp.lt.s32.totalorder %v310, 15
      %vm428 = vcmp.lt.s32.totalorder %v311, 15
      %v429 = vsel %vm427, %v425, 0.0
      %v430 = vsel %vm428, %v426, 0.0
      %v431 = vpack.c.bf16 %v430, %v429
      %s432 = scalar_lea.vmem %s2, 8
      %v433 = vld [vmem:[%s432] sm:$0xf]
      %v435 = vsel %vm326, %v431, 0
      %v438 = vsel %vm330, %v433, 0
      %440 = vmatprep.subr.bf16.mxu0 0
      %441 = vmatpush1.bf16.msra.mxu0 0
      %442 = vmatprep.subr.bf16.mxu0 0
      %443 = vmatpush1.bf16.msra.mxu0 0
      %444 = vmatprep.subr.bf16.mxu0 0
      %445 = vmatpush1.bf16.msra.mxu0 0
      %446 = vmatprep.subr.bf16.mxu0 0
      %447 = vmatpush1.bf16.msra.mxu0 0
      %448 = vmatprep.subr.bf16.mxu0 0
      %449 = vmatpush1.bf16.msra.mxu0 0
      %450 = vmatprep.subr.bf16.mxu0 0
      %451 = vmatpush1.bf16.msra.mxu0 0
      %452 = vmatprep.subr.bf16.mxu0 0
      %453 = vmatpush1.bf16.msra.mxu0 0
      %454 = vmatprep.subr.bf16.mxu0 0
      %455 = vmatpush1.bf16.msra.mxu0 %v438
      %456 = vmatprep.subr.bf16.mxu0 0
      %457 = vmatpush2.bf16.msra.mxu0 0
      %458 = vmatprep.subr.bf16.mxu0 0
      %459 = vmatpush2.bf16.msra.mxu0 0
      %460 = vmatprep.subr.bf16.mxu0 0
      %461 = vmatpush2.bf16.msra.mxu0 0
      %462 = vmatprep.subr.bf16.mxu0 0
      %463 = vmatpush2.bf16.msra.mxu0 0
      %464 = vmatprep.subr.bf16.mxu0 0
      %465 = vmatpush2.bf16.msra.mxu0 0
      %466 = vmatprep.subr.bf16.mxu0 0
      %467 = vmatpush2.bf16.msra.mxu0 0
      %468 = vmatprep.subr.bf16.mxu0 0
      %469 = vmatpush2.bf16.msra.mxu0 0
      %470 = vmatprep.subr.bf16.mxu0 0
      %471 = vmatpush2.bf16.msra.mxu0 0
      %472 = vmatprep.mubr.bf16.mxu0 0
      %473 = vmatmul.mubr.bf16.gmra.mxu0 %v435
      %v474 = vpop.f32.mrf.mxu0
      %v475 = vadd.f32 0.0, %v474
      %v476 = vpop.f32.mrf.mxu0
      %v477 = vpop.f32.mrf.mxu0
      %v478 = vadd.f32 0.0, %v477
      %v479 = vpop.f32.mrf.mxu0
      %480 = vdwg.mxu0
      %v481 = vadd.f32 %v416, %v475
      %v482 = vadd.f32 %v419, %v478
      %v483 = vld [vmem:[%s3] sm:$0x1]
      %v485 = vlaneseq
      %v486 = vshrl.u32 %v485, 7
      %v487 = vsub.s32 0, %v486
      %v488 = vrot.slane %v483, %v487
      %v490 = vadd.f32 %v481, %v488
      %v491 = vadd.f32 %v482, %v488
      %v492 = vld [vmem:[%s295] sm:$0x1]
      %v494 = vlaneseq
      %v495 = vshrl.u32 %v494, 7
      %v496 = vsub.s32 0, %v495
      %v497 = vrot.slane %v492, %v496
      %v499 = vmul.f32 %v490, %v497
      %v500 = vmul.f32 %v491, %v497
      %501 = vst.msk [vmem:[%s300] sm:$0xff] %vm326, %v499
      %502 = vst.msk [vmem:[%s300 + $0x8] sm:$0xff] %vm326, %v500
      %v503 = vpack.c.bf16 %v500, %v499
      %v504 = vld [vmem:[%s4] sm:$0xf]
      %v505 = vld [vmem:[%s5] sm:$0x1]
      %v507 = vlaneseq
      %v508 = vshrl.u32 %v507, 7
      %v509 = vsub.s32 0, %v508
      %v510 = vrot.slane %v505, %v509
      %v513 = vsel %vm326, %v503, 0
      %v516 = vsel %vm330, %v504, 0
      %518 = vmatprep.subr.bf16.mxu0 0
      %519 = vmatpush1.bf16.msra.mxu0 0
      %520 = vmatprep.subr.bf16.mxu0 0
      %521 = vmatpush1.bf16.msra.mxu0 0
      %522 = vmatprep.subr.bf16.mxu0 0
      %523 = vmatpush1.bf16.msra.mxu0 0
      %524 = vmatprep.subr.bf16.mxu0 0
      %525 = vmatpush1.bf16.msra.mxu0 0
      %526 = vmatprep.subr.bf16.mxu0 0
      %527 = vmatpush1.bf16.msra.mxu0 0
      %528 = vmatprep.subr.bf16.mxu0 0
      %529 = vmatpush1.bf16.msra.mxu0 0
      %530 = vmatprep.subr.bf16.mxu0 0
      %531 = vmatpush1.bf16.msra.mxu0 0
      %532 = vmatprep.subr.bf16.mxu0 0
      %533 = vmatpush1.bf16.msra.mxu0 %v516
      %534 = vmatprep.subr.bf16.mxu0 0
      %535 = vmatpush2.bf16.msra.mxu0 0
      %536 = vmatprep.subr.bf16.mxu0 0
      %537 = vmatpush2.bf16.msra.mxu0 0
      %538 = vmatprep.subr.bf16.mxu0 0
      %539 = vmatpush2.bf16.msra.mxu0 0
      %540 = vmatprep.subr.bf16.mxu0 0
      %541 = vmatpush2.bf16.msra.mxu0 0
      %542 = vmatprep.subr.bf16.mxu0 0
      %543 = vmatpush2.bf16.msra.mxu0 0
      %544 = vmatprep.subr.bf16.mxu0 0
      %545 = vmatpush2.bf16.msra.mxu0 0
      %546 = vmatprep.subr.bf16.mxu0 0
      %547 = vmatpush2.bf16.msra.mxu0 0
      %548 = vmatprep.subr.bf16.mxu0 0
      %549 = vmatpush2.bf16.msra.mxu0 0
      %550 = vmatprep.mubr.bf16.mxu0 0
      %551 = vmatmul.mubr.bf16.gmra.mxu0 %v513
      %v552 = vpop.f32.mrf.mxu0
      %v553 = vadd.f32 %v510, %v552
      %v554 = vpop.f32.mrf.mxu0
      %v555 = vpop.f32.mrf.mxu0
      %v556 = vadd.f32 %v510, %v555
      %v557 = vpop.f32.mrf.mxu0
      %558 = vdwg.mxu0
      %v559 = vsel %vm330, %v553, -inf
      %v560 = vrot.slane %v559, 4
      %v561 = vmax.f32 %v559, %v560
      %v562 = vrot.slane %v561, 2
      %v563 = vmax.f32 %v561, %v562
      %v564 = vrot.slane %v563, 1
      %v565 = vmax.f32 %v563, %v564
      %vm566 = vcmask 1047556
      %v567 = vsel %vm566, %v553, -inf
      %v568 = vrot.slane %v567, 4
      %v569 = vmax.f32 %v567, %v568
      %v570 = vrot.slane %v569, 2
      %v571 = vmax.f32 %v569, %v570
      %v572 = vrot.slane %v571, 1
      %v573 = vmax.f32 %v571, %v572
      %v574 = vsel %vm330, %v556, -inf
      %v575 = vrot.slane %v574, 4
      %v576 = vmax.f32 %v574, %v575
      %v577 = vrot.slane %v576, 2
      %v578 = vmax.f32 %v576, %v577
      %v579 = vrot.slane %v578, 1
      %v580 = vmax.f32 %v578, %v579
      %v581 = vsel %vm566, %v556, -inf
      %v582 = vrot.slane %v581, 4
      %v583 = vmax.f32 %v581, %v582
      %v584 = vrot.slane %v583, 2
      %v585 = vmax.f32 %v583, %v584
      %v586 = vrot.slane %v585, 1
      %v587 = vmax.f32 %v585, %v586
      %vm588 = vcmask 1045504
      %v589 = vsel %vm588, %v553, -inf
      %v590 = vrot.slane %v589, 4
      %v591 = vmax.f32 %v589, %v590
      %v592 = vrot.slane %v591, 2
      %v593 = vmax.f32 %v591, %v592
      %v594 = vrot.slane %v593, 1
      %v595 = vmax.f32 %v593, %v594
      %vm596 = vcmask 1047558
      %v597 = vsel %vm596, %v553, -inf
      %v598 = vmax.f32 %v597, %v574
      %v599 = vrot.slane %v598, 4
      %v600 = vmax.f32 %v598, %v599
      %v601 = vrot.slane %v600, 2
      %v602 = vmax.f32 %v600, %v601
      %v603 = vrot.slane %v602, 1
      %v604 = vmax.f32 %v602, %v603
      %v605 = vmax.f32 %v565, %v573
      %v606 = vmax.f32 %v580, %v587
      %v607 = vmax.f32 %v605, %v606
      %vm608 = vcmask 1040384
      %v609 = vsel %vm608, %v607, %v605
      %vm610 = vcmask 1041408
      %v611 = vsel %vm610, %v609, %v606
      %vm612 = vcmask 1042432
      %v613 = vsel %vm612, %v611, %v595
      %v614 = vsel %vm330, %v613, %v604
      %vm615 = vcmask 1044480
      %v616 = vsel %vm615, %v614, %v587
      %v617 = vsel %vm588, %v616, %v565
      %vm618 = vcmask 1046528
      %v619 = vsel %vm618, %v617, %v573
      %v620 = vsel %vm608, %v580, %v587
      %621 = vst [vmem:[%s305] sm:$0xff] %v619
      %622 = vst [vmem:[%s305 + $0x8] sm:$0x3] %v620
      %p623 = scmp.lt.s32.totalorder %s19, 1
      %s624 = scalar_select %p623, %s19, 1
      %s625 = smul.addr %s624, 2
      %s626 = smul.addr %s625, 8
      %s627 = scalar_lea.vmem %s6, %s626
      %p628 = scmp.lt.s32.totalorder %s19, 1
      %s629 = scalar_select %p628, %s19, 1
      %s630 = smul.addr %s629, 2
      %s631 = smul.addr %s630, 8
      %s632 = scalar_lea.vmem %s7, %s631
      // Predicated region
      $region45: #{tpu_custom_call.1} parent=43 // pred_check
        %p633 = pneg %p173
      $region46: #{tpu_custom_call.1} parent=43 // pred_check_branch
        %635 = sbr.rel (%p633) target = $region48
      $region47: #{tpu_custom_call.1} parent=43 // pred_region
        _
      $region48: #{tpu_custom_call.1} parent=43 // pred_fallthru
        _
      // Predicated region
      $region49: #{tpu_custom_call.1} parent=43 // pred_check
        %p636 = pneg %p199
      $region50: #{tpu_custom_call.1} parent=43 // pred_check_branch
        %638 = sbr.rel (%p636) target = $region52
      $region51: #{tpu_custom_call.1} parent=43 // pred_region
        _
      $region52: #{tpu_custom_call.1} parent=43 // pred_fallthru
        _
    $region44: #{tpu_custom_call.1} parent=5 // pred_fallthru
      _
    %p639 = scmp.le.s32.totalorder 2, %s14
    // Predicated region
    $region53: #{tpu_custom_call.1} parent=5 // pred_check
      %p640 = pneg %p639
    $region54: #{tpu_custom_call.1} parent=5 // pred_check_branch
      %642 = sbr.rel (%p640) target = $region56
    $region55: #{tpu_custom_call.1} parent=5 // pred_region
      %s643 = ssub.s32 %s14, 2
      // Predicated region
      $region57: #{tpu_custom_call.1} parent=55 // pred_check
        %p644 = pneg %p179
      $region58: #{tpu_custom_call.1} parent=55 // pred_check_branch
        %646 = sbr.rel (%p644) target = $region60
      $region59: #{tpu_custom_call.1} parent=55 // pred_region
        %p647 = scmp.lt.s32.totalorder %s20, 1
        %s648 = scalar_select %p647, %s20, 1
        %s649 = smul.addr %s648, 2
        %s650 = smul.addr %s649, 8
        %s651 = scalar_lea.vmem %s6, %s650
      $region60: #{tpu_custom_call.1} parent=55 // pred_fallthru
        _
      // Predicated region
      $region61: #{tpu_custom_call.1} parent=55 // pred_check
        %p652 = pneg %p205
      $region62: #{tpu_custom_call.1} parent=55 // pred_check_branch
        %654 = sbr.rel (%p652) target = $region64
      $region63: #{tpu_custom_call.1} parent=55 // pred_region
        %p655 = scmp.lt.s32.totalorder %s20, 1
        %s656 = scalar_select %p655, %s20, 1
        %s657 = smul.addr %s656, 2
        %s658 = smul.addr %s657, 8
        %s659 = scalar_lea.vmem %s7, %s658
      $region64: #{tpu_custom_call.1} parent=55 // pred_fallthru
        _
    $region56: #{tpu_custom_call.1} parent=5 // pred_fallthru
      _
  $region6: #{tpu_custom_call.1} parent=0 // loop_footer
    %s18 = sadd.s32 1, %s14
  $region7: #{tpu_custom_call.1} parent=0 // loop_footer_branch
    %13 = sbr.rel target = $region3
  $region8: #{tpu_custom_call.1} parent=0 // loop_exit
    _

</llo_original>
